<compile_context>
chip_gen: v7x
topology: tpu7x:2x2x1
jax: 0.10.0
libtpu: 0.0.40
codegen_flags: <defaults>
</compile_context>

<pallas_src>
import functools
import math

import jax
import jax.numpy as jnp
from jax.experimental import pallas as pl
from jax.experimental.pallas import tpu as pltpu


def _round_up(x, m):
    return ((x + m - 1) // m) * m


# ----------------------------------------------------------------------------
# Pallas kernels: MXU matmul with fused activation epilogue
# ----------------------------------------------------------------------------
def _apply_activation(r, activation):
    if activation == "relu":
        return jnp.maximum(r, 0.0)
    if activation == "sigmoid":
        return jax.nn.sigmoid(r)
    if activation == "relu_sigmoid":          # sigmoid(relu(x))
        return jax.nn.sigmoid(jnp.maximum(r, 0.0))
    return r


def _mm_kernel_single(a_ref, b_ref, o_ref, *, activation):
    """Single reduction step: write act(A @ B) straight to the output tile."""
    r = jnp.dot(a_ref[...], b_ref[...], preferred_element_type=jnp.float32)
    o_ref[...] = _apply_activation(r, activation).astype(o_ref.dtype)


def _mm_kernel_multi(a_ref, b_ref, o_ref, acc_ref, *, activation):
    """K-tiled path: accumulate in f32 scratch, activation + cast at the end."""
    @pl.when(pl.program_id(2) == 0)
    def _():
        acc_ref[...] = jnp.zeros_like(acc_ref)

    acc_ref[...] += jnp.dot(a_ref[...], b_ref[...],
                            preferred_element_type=jnp.float32)

    @pl.when(pl.program_id(2) == pl.num_programs(2) - 1)
    def _():
        o_ref[...] = _apply_activation(acc_ref[...], activation).astype(o_ref.dtype)


# ----------------------------------------------------------------------------
# Tile selection (byte-budgeted; few grid steps; v7x-safe panels)
# ----------------------------------------------------------------------------
_VMEM_BUDGET = 24 * 1024 * 1024   # per-call working-set target (all TPU gens)
_B_PANEL_CAP = 16 * 1024 * 1024   # double-buffered RHS panel cap (v7x 64 MiB VMEM)
_VMEM_LIMIT = 32 * 1024 * 1024    # explicit scoped-VMEM limit (v5e default is 16 MiB)


def _choose_tiles(M, K, N, out_itemsize):
    """Tile/padded-shape choice for a bf16 (M, K) @ (K, N) MXU matmul.

    Goals: single full-K step whenever the RHS panel fits, lane-dense
    (>=128-multiple or full-dim) output tiles, >= 2 output blocks so both v7x
    TensorCores get work, 16-aligned sublane tiles for bf16, and a working set
    that fits scoped VMEM on every generation."""
    Mp = _round_up(max(M, 1), 16)
    tm = Mp if Mp <= 1024 else 512
    Mp = _round_up(Mp, tm)
    Kp = _round_up(max(K, 1), 16)

    if N < 128:
        Np = tn = N                                    # full (small) lane dim
    else:
        Np = tn = _round_up(N, 128)
        half = _round_up(N, 256)
        if (Mp // tm) < 2 and N >= 256 and half - N <= max(N // 8, 128):
            Np, tn = half, half // 2                   # 2 parallel output blocks

    def _fits(tk_, tn_):
        multi = tk_ < Kp
        b_panel = 2 * tk_ * tn_ * 2                    # bf16, double buffered
        total = (2 * tm * tk_ * 2 + b_panel + 2 * tm * tn_ * out_itemsize
                 + (tm * tn_ * 4 if multi else 0))
        return b_panel <= _B_PANEL_CAP and total <= _VMEM_BUDGET

    tk = Kp
    if not _fits(tk, tn):
        tk = 0
        for d in range(2, 257):                        # split the reduction axis
            c = Kp // d
            if Kp % d == 0 and c % 128 == 0 and _fits(c, tn):
                tk = c
                break
        if tk == 0:                                    # fallback: shrink lanes too
            tk = 128 if Kp % 128 == 0 else Kp
            while tn > 128 and not _fits(tk, tn):
                tn = max(128, (tn // 2) // 128 * 128)
                Np = _round_up(N, tn)
    return tm, Mp, tk, Kp, tn, Np


def pallas_matmul(a, b, activation=None, out_dtype=jnp.bfloat16):
    """(M, K) @ (K, N) on the MXU: bf16 operands, f32 accumulation,
    fused activation epilogue, output cast to `out_dtype`."""
    M, K = a.shape
    K2, N = b.shape
    assert K == K2, (a.shape, b.shape)

    a = a.astype(jnp.bfloat16)
    b = b.astype(jnp.bfloat16)
    out_itemsize = jnp.dtype(out_dtype).itemsize
    tm, Mp, tk, Kp, tn, Np = _choose_tiles(M, K, N, out_itemsize)

    a_p = a if (Mp == M and Kp == K) else jnp.pad(a, ((0, Mp - M), (0, Kp - K)))
    b_p = b if (Kp == K and Np == N) else jnp.pad(b, ((0, Kp - K), (0, Np - N)))

    nk = Kp // tk
    if nk == 1:
        kernel = functools.partial(_mm_kernel_single, activation=activation)
        grid = (Mp // tm, Np // tn)
        in_specs = [pl.BlockSpec((tm, Kp), lambda i, j: (i, 0)),
                    pl.BlockSpec((Kp, tn), lambda i, j: (0, j))]
        out_specs = pl.BlockSpec((tm, tn), lambda i, j: (i, j))
        scratch = []
        dims = ("parallel", "parallel")
    else:
        kernel = functools.partial(_mm_kernel_multi, activation=activation)
        grid = (Mp // tm, Np // tn, nk)
        in_specs = [pl.BlockSpec((tm, tk), lambda i, j, k: (i, k)),
                    pl.BlockSpec((tk, tn), lambda i, j, k: (k, j))]
        out_specs = pl.BlockSpec((tm, tn), lambda i, j, k: (i, j))
        scratch = [pltpu.VMEM((tm, tn), jnp.float32)]
        dims = ("parallel", "parallel", "arbitrary")

    out = pl.pallas_call(
        kernel,
        out_shape=jax.ShapeDtypeStruct((Mp, Np), out_dtype),
        grid_spec=pltpu.PrefetchScalarGridSpec(
            num_scalar_prefetch=0,
            grid=grid,
            in_specs=in_specs,
            out_specs=out_specs,
            scratch_shapes=scratch),
        compiler_params=pltpu.CompilerParams(
            dimension_semantics=dims,
            vmem_limit_bytes=_VMEM_LIMIT),
    )(a_p, b_p)

    if Mp != M or Np != N:
        out = out[:M, :N]
    return out


# ----------------------------------------------------------------------------
# Weight preparation (done once, outside the forward pass)
# ----------------------------------------------------------------------------
def _convt_weight_matrix(w_iohw):
    """ConvTranspose2d(k=4,s=2,p=1) weight (Ci, Co, 4, 4) -> sub-pixel matmul
    weight (4*Ci, 4*Co): rows ordered (a, b, ci) over the 2x2 taps of each
    phase conv, cols ordered (ry, rx, co) over the 4 output phases.
    Phase kernel: K[ry,rx][a,b] = W[:, :, 3-2a-ry, 3-2b-rx]."""
    ci, co = w_iohw.shape[:2]
    wf = w_iohw[:, :, ::-1, ::-1]                    # spatial flip
    wf = wf.reshape(ci, co, 2, 2, 2, 2)              # (ci, co, a, ry, b, rx)
    wf = jnp.transpose(wf, (2, 4, 0, 3, 5, 1))       # (a, b, ci, ry, rx, co)
    return wf.reshape(4 * ci, 4 * co)


def _conv3_weight_matrix(w_oihw):
    """Conv2d 3x3 weight (Co, Ci, 3, 3) -> (9*Ci, Co), rows ordered (dh, dw, ci)."""
    co, ci = w_oihw.shape[:2]
    return jnp.transpose(w_oihw, (2, 3, 1, 0)).reshape(9 * ci, co)


# ----------------------------------------------------------------------------
# Conv ops (im2col glue + one Pallas MXU matmul each)
# ----------------------------------------------------------------------------
def conv_transpose2d_nhwc(x, w_mat, co, out_dtype, activation):
    """ConvTranspose2d(k=4, s=2, p=1, bias=False) via sub-pixel decomposition.
    x: (N, H, W, Ci).  w_mat: (4*Ci, 4*Co).  Returns (N, 2H, 2W, Co)."""
    n, h, w, ci = x.shape
    xp = jnp.pad(x, ((0, 0), (1, 1), (1, 1), (0, 0)))
    hp, wp = h + 1, w + 1
    cols = [xp[:, a:a + hp, b:b + wp, :] for a in range(2) for b in range(2)]
    patches = jnp.concatenate(cols, axis=-1).reshape(n * hp * wp, 4 * ci)
    big = pallas_matmul(patches, w_mat, activation, out_dtype)
    big = big.reshape(n, hp, wp, 2, 2, co)
    phases = [big[:, ry:ry + h, rx:rx + w, ry, rx, :]
              for ry in range(2) for rx in range(2)]
    st = jnp.stack(phases, axis=0).reshape(2, 2, n, h, w, co)
    return jnp.transpose(st, (2, 3, 0, 4, 1, 5)).reshape(n, 2 * h, 2 * w, co)


def conv2d_nhwc(x, w_mat, co, out_dtype, activation):
    """Conv2d(k=3, s=1, p=1, bias=False). x: (N,H,W,Ci), w_mat: (9*Ci, Co)."""
    n, h, w, ci = x.shape
    xp = jnp.pad(x, ((0, 0), (1, 1), (1, 1), (0, 0)))
    cols = [xp[:, dh:dh + h, dw:dw + w, :] for dh in range(3) for dw in range(3)]
    patches = jnp.concatenate(cols, axis=-1).reshape(n * h * w, 9 * ci)
    out = pallas_matmul(patches, w_mat, activation, out_dtype)
    return out.reshape(n, h, w, co)


def conv_transpose2d_cm(x, w_mat_t, co, out_dtype, activation):
    """Channel-major (lane-dense) variant for tiny Co.
    x: (Ci, N, H, W).  w_mat_t: (4*Co, 4*Ci).  Returns (Co, N, 2H, 2W)."""
    ci, n, h, w = x.shape
    xp = jnp.pad(x, ((0, 0), (0, 0), (1, 1), (1, 1)))
    hp, wp = h + 1, w + 1
    cols = [xp[:, :, a:a + hp, b:b + wp] for a in range(2) for b in range(2)]
    patches_t = jnp.concatenate(cols, axis=0).reshape(4 * ci, n * hp * wp)
    big = pallas_matmul(w_mat_t, patches_t, activation, out_dtype)
    big = big.reshape(2, 2, co, n, hp, wp)
    phases = [big[ry, rx, :, :, ry:ry + h, rx:rx + w]
              for ry in range(2) for rx in range(2)]
    st = jnp.stack(phases, axis=0).reshape(2, 2, co, n, h, w)
    return jnp.transpose(st, (2, 3, 4, 0, 5, 1)).reshape(co, n, 2 * h, 2 * w)


def conv2d_cm(x, w_mat_t, co, out_dtype, activation):
    """Channel-major Conv2d(k=3, s=1, p=1). x: (Ci,N,H,W), w_mat_t: (Co, 9*Ci)."""
    ci, n, h, w = x.shape
    xp = jnp.pad(x, ((0, 0), (0, 0), (1, 1), (1, 1)))
    cols = [xp[:, :, dh:dh + h, dw:dw + w] for dh in range(3) for dw in range(3)]
    patches_t = jnp.concatenate(cols, axis=0).reshape(9 * ci, n * h * w)
    out = pallas_matmul(w_mat_t, patches_t, activation, out_dtype)
    return out.reshape(co, n, h, w)


# ----------------------------------------------------------------------------
# Decoder parameters
# ----------------------------------------------------------------------------
def init_deconv2d_params(key, c_in, c_out):
    k1, k2, k3 = jax.random.split(key, 3)
    wt1 = jax.random.normal(k1, (c_in, c_out * 2, 4, 4), jnp.float32) \
        * (1.0 / math.sqrt(c_in * 16))
    wt2 = jax.random.normal(k2, (c_out * 2, c_out, 4, 4), jnp.float32) \
        * (1.0 / math.sqrt(c_out * 2 * 16))
    wc = jax.random.normal(k3, (c_out, c_out, 3, 3), jnp.float32) \
        * (1.0 / math.sqrt(c_out * 9))
    return wt1, wt2, wc


def init_decoder_params(key, feature_size, channel):
    keys = jax.random.split(key, 3)
    return [
        init_deconv2d_params(keys[0], feature_size * 2, 768),
        init_deconv2d_params(keys[1], 768, 128),
        init_deconv2d_params(keys[2], 128, channel),
    ]


def prepare_decoder_params(raw_params):
    """Precompute flipped/transposed bf16 matmul weights + per-block meta."""
    weights, meta = [], []
    for wt1, wt2, wc in raw_params:
        co1 = wt1.shape[1]          # = c_out * 2
        co2 = wt2.shape[1]          # = c_out
        cm = co1 <= 32              # tiny-channel block -> channel-major path
        m1 = _convt_weight_matrix(wt1)       # (4*Ci,  4*co1)
        m2 = _convt_weight_matrix(wt2)       # (4*co1, 4*co2)
        m3 = _conv3_weight_matrix(wc)        # (9*co2, co2)
        if cm:                               # lane-dense transposed layout
            m1, m2, m3 = m1.T, m2.T, m3.T
        weights.append((m1.astype(jnp.bfloat16),
                        m2.astype(jnp.bfloat16),
                        m3.astype(jnp.bfloat16)))
        meta.append((co1, co2, cm))
    return weights, tuple(meta)


# ----------------------------------------------------------------------------
# Decoder forward
# ----------------------------------------------------------------------------
def decoder_forward(x_nchw, weights, *, meta):
    """x_nchw: (N, feature_size*2, H, W) -> (N, channel, 64H, 64W) float32."""
    x = jnp.transpose(x_nchw, (0, 2, 3, 1)).astype(jnp.bfloat16)   # -> NHWC
    channel_major = False
    n_blocks = len(weights)
    for bi, ((m1, m2, m3), (co1, co2, cm)) in enumerate(zip(weights, meta)):
        last = bi == n_blocks - 1
        # deconv2d block: ConvT -> ReLU -> ConvT -> Conv3x3 -> ReLU;
        # the Decoder's final sigmoid is fused into the last block's conv.
        final_act = "relu_sigmoid" if last else "relu"
        final_dt = jnp.float32 if last else jnp.bfloat16
        if cm:
            if not channel_major:
                x = jnp.transpose(x, (3, 0, 1, 2))      # NHWC -> (C, N, H, W)
                channel_major = True
            x = conv_transpose2d_cm(x, m1, co1, jnp.bfloat16, "relu")
            x = conv_transpose2d_cm(x, m2, co2, jnp.bfloat16, None)
            x = conv2d_cm(x, m3, co2, final_dt, final_act)
        else:
            x = conv_transpose2d_nhwc(x, m1, co1, jnp.bfloat16, "relu")
            x = conv_transpose2d_nhwc(x, m2, co2, jnp.bfloat16, None)
            x = conv2d_nhwc(x, m3, co2, final_dt, final_act)
    if channel_major:
        return jnp.transpose(x, (1, 0, 2, 3))           # (C,N,H,W) -> NCHW
    return jnp.transpose(x, (0, 3, 1, 2)).astype(jnp.float32)


if __name__ == "__main__":
    batch, feature_size, channel = 2, 4, 3
    h = w = 2  # each deconv2d block upsamples 4x -> output spatial 128x128

    key = jax.random.PRNGKey(0)
    kx, kp = jax.random.split(key)
    x = jax.random.normal(kx, (batch, feature_size * 2, h, w), jnp.float32)
    raw_params = init_decoder_params(kp, feature_size, channel)
    weights, meta = prepare_decoder_params(raw_params)

    # Light numerical cross-check: the channel-major ConvT lowering must match
    # the NHWC lowering (same math, different layout) on block-3's first layer.
    m1_cm = weights[2][0]                           # (4*co1, 4*ci) bf16
    co1_b3 = meta[2][0]
    xs = jax.random.normal(jax.random.PRNGKey(1),
                           (2, 8, 8, m1_cm.shape[1] // 4),
                           jnp.float32).astype(jnp.bfloat16)
    y_nhwc = conv_transpose2d_nhwc(xs, m1_cm.T, co1_b3, jnp.float32, "relu")
    y_cm = conv_transpose2d_cm(jnp.transpose(xs, (3, 0, 1, 2)), m1_cm,
                               co1_b3, jnp.float32, "relu")
    y_cm = jnp.transpose(y_cm, (1, 2, 3, 0))
    err = float(jnp.max(jnp.abs(y_nhwc - y_cm)))
    assert err < 1e-2, f"channel-major / NHWC ConvT mismatch: {err}"

    fwd = jax.jit(functools.partial(decoder_forward, meta=meta))
    out = jax.block_until_ready(fwd(x, weights))

    assert out.shape == (batch, channel, h * 64, w * 64), out.shape
    assert out.dtype == jnp.float32, out.dtype
    assert bool(jnp.all(jnp.isfinite(out)))
    # final op is sigmoid(relu(.)) computed in f32 -> values in [0.5, 1.0]
    assert bool(jnp.all((out >= 0.5) & (out <= 1.0)))
    print("KERNEL_OK")
</pallas_src>

<mosaic_0001>
module attributes {stable_mosaic.version = 11 : i64} {
  func.func @_mm_kernel_single(%arg0: i32, %arg1: i32, %arg2: memref<176x512xbf16, #tpu.memory_space<vmem>>, %arg3: memref<512x24xbf16, #tpu.memory_space<vmem>>, %arg4: memref<176x24xf32, #tpu.memory_space<vmem>>) attributes {dimension_semantics = [#tpu.dimension_semantics<parallel>, #tpu.dimension_semantics<parallel>], iteration_bounds = array<i64: 1, 1>, scalar_prefetch = 0 : i64, scratch_operands = 0 : i64, tpu.core_type = #tpu.core_type<tc>, window_params = [{transform_indices = @transform_0, window_bounds = array<i64: 176, 512>}, {transform_indices = @transform_1, window_bounds = array<i64: 512, 24>}, {transform_indices = @transform_2, window_bounds = array<i64: 176, 24>}]} {
    %c0 = arith.constant 0 : index
    %c0_0 = arith.constant 0 : index
    %0 = vector.load %arg2[%c0, %c0_0] : memref<176x512xbf16, #tpu.memory_space<vmem>>, vector<176x512xbf16>
    %c0_1 = arith.constant 0 : index
    %c0_2 = arith.constant 0 : index
    %1 = vector.load %arg3[%c0_1, %c0_2] : memref<512x24xbf16, #tpu.memory_space<vmem>>, vector<512x24xbf16>
    %cst = arith.constant dense<0.000000e+00> : vector<176x24xf32>
    %2 = tpu.matmul %0, %1, %cst {dimension_numbers = #tpu.dot_dimension_numbers<[1], [0], [0], [1], [0, 0, 1, 1], [], []>} : vector<176x512xbf16>, vector<512x24xbf16>, vector<176x24xf32> -> vector<176x24xf32>
    %cst_3 = arith.constant 0.000000e+00 : f32
    %3 = vector.broadcast %cst_3 : f32 to vector<176x24xf32>
    %4 = arith.maximumf %2, %3 : vector<176x24xf32>
    %c0_4 = arith.constant 0 : index
    %c0_5 = arith.constant 0 : index
    %5 = vector.load %arg4[%c0_4, %c0_5] : memref<176x24xf32, #tpu.memory_space<vmem>>, vector<176x24xf32>
    tpu.vector_store %arg4[%c0_4, %c0_5], %4 {strides = array<i32>} : memref<176x24xf32, #tpu.memory_space<vmem>>, vector<176x24xf32>,
    return
  }
  func.func @transform_0(%arg0: i32, %arg1: i32) -> (i32, i32) {
    %c0_i32 = arith.constant 0 : i32
    %c0_i32_0 = arith.constant 0 : i32
    return %arg0, %c0_i32 : i32, i32
  }
  func.func @transform_1(%arg0: i32, %arg1: i32) -> (i32, i32) {
    %c0_i32 = arith.constant 0 : i32
    %c0_i32_0 = arith.constant 0 : i32
    return %c0_i32, %arg1 : i32, i32
  }
  func.func @transform_2(%arg0: i32, %arg1: i32) -> (i32, i32) {
    %c0_i32 = arith.constant 0 : i32
    return %arg0, %arg1 : i32, i32
  }
}

</mosaic_0001>

<llo_original>
// kernel: tpu_custom_call.1
$region0: #{tpu_custom_call.1}
  #allocation0 [shape = 'u32[]', space=smem, size = 0x4, offset = 0x4, fixed_abs, tag = 'smem constant byte address 0x4 - core index']
  #allocation1 [shape = 'u32[144,128]{1,0:T(1,128)}', space=vmem, size = 0x12000, scoped, tag = 'internal scratch']
  %s0 = inlined_call_operand.hbm [shape: bf16[176,512], index: 0, kind: input, shape index: {}]
  %s1 = inlined_call_operand.vmem [shape: bf16[512,24], index: 1, kind: input, shape index: {}]
  %s2 = inlined_call_operand.vmem [shape: f32[176,24], index: 2, kind: output, shape index: {}]
  %s3 = sld [smem:[#allocation0]]
  $region22: #{tpu_custom_call.1} parent=0
    _
  %s5 = ssub.s32 1, %s3
  %s6 = scalar_select 0, %s5, %s3
  $region1: #{tpu_custom_call.1} parent=0
    #allocation2 [shape = 'u8[180224]{0}', space=vmem, size = 0x2c000, scoped, tag = 'input window, operand 0, single buffered']
    #allocation3 [shape = 's32[1]{0}', space=sflag, size = 0x4, scoped, tag = 'scoped memory for tpu_custom_call.1']
    %7 = vsyncpa [#allocation3], 0
    // Predicated region
    $region2: #{tpu_custom_call.1} parent=1 // pred_check
      _
    $region3: #{tpu_custom_call.1} parent=1 // pred_check_branch
      %9 = sbr.rel (0) target = $region5
    $region4: #{tpu_custom_call.1} parent=1 // pred_region
      %s11 = ssub.s32 5632, 5632
      %12 = vsyncadd [#allocation3], %s11
      %s13 = sshll.u32 [#allocation2], 4
      %s14 = int_to_ptr.vmem [resolvable:$true] %s13
      %19 = dma.hbm_to_vmem [thread:$0]  %s0, 5632, %s14, [#allocation3], 256, 256, 16
    $region5: #{tpu_custom_call.1} parent=1 // pred_fallthru
      _
    // Predicated region
    $region6: #{tpu_custom_call.1} parent=1 // pred_check
      _
    $region7: #{tpu_custom_call.1} parent=1 // pred_check_branch
      %21 = sbr.rel (0) target = $region9
    $region8: #{tpu_custom_call.1} parent=1 // pred_region
      _
    $region9: #{tpu_custom_call.1} parent=1 // pred_fallthru
      _
    // Predicated region
    $region10: #{tpu_custom_call.1} parent=1 // pred_check
      _
    $region11: #{tpu_custom_call.1} parent=1 // pred_check_branch
      %23 = sbr.rel (0) target = $region13
    $region12: #{tpu_custom_call.1} parent=1 // pred_region
      %24 = dma.done [#allocation3], 5632
    $region13: #{tpu_custom_call.1} parent=1 // pred_fallthru
      _
    %v26 = vld [vmem:[#allocation2] sm:$0xff]
    %v27 = vld [vmem:[#allocation2 + $0x8] sm:$0xff]
    %v28 = vld [vmem:[#allocation2 + $0x10] sm:$0xff]
    %v29 = vld [vmem:[#allocation2 + $0x18] sm:$0xff]
    %v30 = vld [vmem:[#allocation2 + $0x20] sm:$0xff]
    %v31 = vld [vmem:[#allocation2 + $0x28] sm:$0xff]
    %v32 = vld [vmem:[#allocation2 + $0x30] sm:$0xff]
    %v33 = vld [vmem:[#allocation2 + $0x38] sm:$0xff]
    %v34 = vld [vmem:[#allocation2 + $0x40] sm:$0xff]
    %v35 = vld [vmem:[#allocation2 + $0x48] sm:$0xff]
    %v36 = vld [vmem:[#allocation2 + $0x50] sm:$0xff]
    %v37 = vld [vmem:[#allocation2 + $0x58] sm:$0xff]
    %v38 = vld [vmem:[#allocation2 + $0x60] sm:$0xff]
    %v39 = vld [vmem:[#allocation2 + $0x68] sm:$0xff]
    %v40 = vld [vmem:[#allocation2 + $0x70] sm:$0xff]
    %v41 = vld [vmem:[#allocation2 + $0x78] sm:$0xff]
    %v42 = vld [vmem:[#allocation2 + $0x80] sm:$0xff]
    %v43 = vld [vmem:[#allocation2 + $0x88] sm:$0xff]
    %v44 = vld [vmem:[#allocation2 + $0x90] sm:$0xff]
    %v45 = vld [vmem:[#allocation2 + $0x98] sm:$0xff]
    %v46 = vld [vmem:[#allocation2 + $0xa0] sm:$0xff]
    %v47 = vld [vmem:[#allocation2 + $0xa8] sm:$0xff]
    %v48 = vld [vmem:[#allocation2 + $0xb0] sm:$0xff]
    %v49 = vld [vmem:[#allocation2 + $0xb8] sm:$0xff]
    %v50 = vld [vmem:[#allocation2 + $0xc0] sm:$0xff]
    %v51 = vld [vmem:[#allocation2 + $0xc8] sm:$0xff]
    %v52 = vld [vmem:[#allocation2 + $0xd0] sm:$0xff]
    %v53 = vld [vmem:[#allocation2 + $0xd8] sm:$0xff]
    %v54 = vld [vmem:[#allocation2 + $0xe0] sm:$0xff]
    %v55 = vld [vmem:[#allocation2 + $0xe8] sm:$0xff]
    %v56 = vld [vmem:[#allocation2 + $0xf0] sm:$0xff]
    %v57 = vld [vmem:[#allocation2 + $0xf8] sm:$0xff]
    %v58 = vld [vmem:[#allocation2 + $0x100] sm:$0xff]
    %v59 = vld [vmem:[#allocation2 + $0x108] sm:$0xff]
    %v60 = vld [vmem:[#allocation2 + $0x110] sm:$0xff]
    %v61 = vld [vmem:[#allocation2 + $0x118] sm:$0xff]
    %v62 = vld [vmem:[#allocation2 + $0x120] sm:$0xff]
    %v63 = vld [vmem:[#allocation2 + $0x128] sm:$0xff]
    %v64 = vld [vmem:[#allocation2 + $0x130] sm:$0xff]
    %v65 = vld [vmem:[#allocation2 + $0x138] sm:$0xff]
    %v66 = vld [vmem:[#allocation2 + $0x140] sm:$0xff]
    %v67 = vld [vmem:[#allocation2 + $0x148] sm:$0xff]
    %v68 = vld [vmem:[#allocation2 + $0x150] sm:$0xff]
    %v69 = vld [vmem:[#allocation2 + $0x158] sm:$0xff]
    %v70 = vld [vmem:[%s1] sm:$0xf]
    %v71 = vld [vmem:[%s1 + $0x4] sm:$0xf]
    %v72 = vld [vmem:[%s1 + $0x8] sm:$0xf]
    %v73 = vld [vmem:[%s1 + $0xc] sm:$0xf]
    %v74 = vld [vmem:[%s1 + $0x10] sm:$0xf]
    %v75 = vld [vmem:[%s1 + $0x14] sm:$0xf]
    %v76 = vld [vmem:[%s1 + $0x18] sm:$0xf]
    %v77 = vld [vmem:[%s1 + $0x1c] sm:$0xf]
    %v78 = vld [vmem:[%s1 + $0x20] sm:$0xf]
    %v79 = vld [vmem:[%s1 + $0x24] sm:$0xf]
    %v80 = vld [vmem:[%s1 + $0x28] sm:$0xf]
    %v81 = vld [vmem:[%s1 + $0x2c] sm:$0xf]
    %v82 = vld [vmem:[%s1 + $0x30] sm:$0xf]
    %v83 = vld [vmem:[%s1 + $0x34] sm:$0xf]
    %v84 = vld [vmem:[%s1 + $0x38] sm:$0xf]
    %v85 = vld [vmem:[%s1 + $0x3c] sm:$0xf]
    %v86 = vld [vmem:[%s1 + $0x40] sm:$0xf]
    %v87 = vld [vmem:[%s1 + $0x44] sm:$0xf]
    %v88 = vld [vmem:[%s1 + $0x48] sm:$0xf]
    %v89 = vld [vmem:[%s1 + $0x4c] sm:$0xf]
    %v90 = vld [vmem:[%s1 + $0x50] sm:$0xf]
    %v91 = vld [vmem:[%s1 + $0x54] sm:$0xf]
    %v92 = vld [vmem:[%s1 + $0x58] sm:$0xf]
    %v93 = vld [vmem:[%s1 + $0x5c] sm:$0xf]
    %v94 = vld [vmem:[%s1 + $0x60] sm:$0xf]
    %v95 = vld [vmem:[%s1 + $0x64] sm:$0xf]
    %v96 = vld [vmem:[%s1 + $0x68] sm:$0xf]
    %v97 = vld [vmem:[%s1 + $0x6c] sm:$0xf]
    %v98 = vld [vmem:[%s1 + $0x70] sm:$0xf]
    %v99 = vld [vmem:[%s1 + $0x74] sm:$0xf]
    %v100 = vld [vmem:[%s1 + $0x78] sm:$0xf]
    %v101 = vld [vmem:[%s1 + $0x7c] sm:$0xf]
    %v102 = vld [vmem:[%s1 + $0x80] sm:$0xf]
    %v103 = vld [vmem:[%s1 + $0x84] sm:$0xf]
    %v104 = vld [vmem:[%s1 + $0x88] sm:$0xf]
    %v105 = vld [vmem:[%s1 + $0x8c] sm:$0xf]
    %v106 = vld [vmem:[%s1 + $0x90] sm:$0xf]
    %v107 = vld [vmem:[%s1 + $0x94] sm:$0xf]
    %v108 = vld [vmem:[%s1 + $0x98] sm:$0xf]
    %v109 = vld [vmem:[%s1 + $0x9c] sm:$0xf]
    %v110 = vld [vmem:[%s1 + $0xa0] sm:$0xf]
    %v111 = vld [vmem:[%s1 + $0xa4] sm:$0xf]
    %v112 = vld [vmem:[%s1 + $0xa8] sm:$0xf]
    %v113 = vld [vmem:[%s1 + $0xac] sm:$0xf]
    %v114 = vld [vmem:[%s1 + $0xb0] sm:$0xf]
    %v115 = vld [vmem:[%s1 + $0xb4] sm:$0xf]
    %v116 = vld [vmem:[%s1 + $0xb8] sm:$0xf]
    %v117 = vld [vmem:[%s1 + $0xbc] sm:$0xf]
    %v118 = vld [vmem:[%s1 + $0xc0] sm:$0xf]
    %v119 = vld [vmem:[%s1 + $0xc4] sm:$0xf]
    %v120 = vld [vmem:[%s1 + $0xc8] sm:$0xf]
    %v121 = vld [vmem:[%s1 + $0xcc] sm:$0xf]
    %v122 = vld [vmem:[%s1 + $0xd0] sm:$0xf]
    %v123 = vld [vmem:[%s1 + $0xd4] sm:$0xf]
    %v124 = vld [vmem:[%s1 + $0xd8] sm:$0xf]
    %v125 = vld [vmem:[%s1 + $0xdc] sm:$0xf]
    %v126 = vld [vmem:[%s1 + $0xe0] sm:$0xf]
    %v127 = vld [vmem:[%s1 + $0xe4] sm:$0xf]
    %v128 = vld [vmem:[%s1 + $0xe8] sm:$0xf]
    %v129 = vld [vmem:[%s1 + $0xec] sm:$0xf]
    %v130 = vld [vmem:[%s1 + $0xf0] sm:$0xf]
    %v131 = vld [vmem:[%s1 + $0xf4] sm:$0xf]
    %v132 = vld [vmem:[%s1 + $0xf8] sm:$0xf]
    %v133 = vld [vmem:[%s1 + $0xfc] sm:$0xf]
    %v178 = vunpack.c.l.b16 %v26
    %v179 = vunpack.c.h.b16 %v26
    %v180 = vunpack.c.l.b16 %v27
    %v181 = vunpack.c.h.b16 %v27
    %v182 = vunpack.c.l.b16 %v28
    %v183 = vunpack.c.h.b16 %v28
    %v184 = vunpack.c.l.b16 %v29
    %v185 = vunpack.c.h.b16 %v29
    %v186 = vunpack.c.l.b16 %v30
    %v187 = vunpack.c.h.b16 %v30
    %v188 = vunpack.c.l.b16 %v31
    %v189 = vunpack.c.h.b16 %v31
    %v190 = vunpack.c.l.b16 %v32
    %v191 = vunpack.c.h.b16 %v32
    %v192 = vunpack.c.l.b16 %v33
    %v193 = vunpack.c.h.b16 %v33
    %v194 = vunpack.c.l.b16 %v34
    %v195 = vunpack.c.h.b16 %v34
    %v196 = vunpack.c.l.b16 %v35
    %v197 = vunpack.c.h.b16 %v35
    %v198 = vunpack.c.l.b16 %v36
    %v199 = vunpack.c.h.b16 %v36
    %v200 = vunpack.c.l.b16 %v37
    %v201 = vunpack.c.h.b16 %v37
    %v202 = vunpack.c.l.b16 %v38
    %v203 = vunpack.c.h.b16 %v38
    %v204 = vunpack.c.l.b16 %v39
    %v205 = vunpack.c.h.b16 %v39
    %v206 = vunpack.c.l.b16 %v40
    %v207 = vunpack.c.h.b16 %v40
    %v208 = vunpack.c.l.b16 %v41
    %v209 = vunpack.c.h.b16 %v41
    %v210 = vunpack.c.l.b16 %v42
    %v211 = vunpack.c.h.b16 %v42
    %v212 = vunpack.c.l.b16 %v43
    %v213 = vunpack.c.h.b16 %v43
    %v214 = vunpack.c.l.b16 %v44
    %v215 = vunpack.c.h.b16 %v44
    %v216 = vunpack.c.l.b16 %v45
    %v217 = vunpack.c.h.b16 %v45
    %v218 = vunpack.c.l.b16 %v46
    %v219 = vunpack.c.h.b16 %v46
    %v220 = vunpack.c.l.b16 %v47
    %v221 = vunpack.c.h.b16 %v47
    %v222 = vunpack.c.l.b16 %v48
    %v223 = vunpack.c.h.b16 %v48
    %v224 = vunpack.c.l.b16 %v49
    %v225 = vunpack.c.h.b16 %v49
    %v226 = vunpack.c.l.b16 %v50
    %v227 = vunpack.c.h.b16 %v50
    %v228 = vunpack.c.l.b16 %v51
    %v229 = vunpack.c.h.b16 %v51
    %v230 = vunpack.c.l.b16 %v52
    %v231 = vunpack.c.h.b16 %v52
    %v232 = vunpack.c.l.b16 %v53
    %v233 = vunpack.c.h.b16 %v53
    %v234 = vunpack.c.l.b16 %v54
    %v235 = vunpack.c.h.b16 %v54
    %v236 = vunpack.c.l.b16 %v55
    %v237 = vunpack.c.h.b16 %v55
    %v238 = vunpack.c.l.b16 %v56
    %v239 = vunpack.c.h.b16 %v56
    %v240 = vunpack.c.l.b16 %v57
    %v241 = vunpack.c.h.b16 %v57
    %v242 = vunpack.c.l.b16 %v58
    %v243 = vunpack.c.h.b16 %v58
    %v244 = vunpack.c.l.b16 %v59
    %v245 = vunpack.c.h.b16 %v59
    %v246 = vunpack.c.l.b16 %v60
    %v247 = vunpack.c.h.b16 %v60
    %v248 = vunpack.c.l.b16 %v61
    %v249 = vunpack.c.h.b16 %v61
    %v250 = vunpack.c.l.b16 %v62
    %v251 = vunpack.c.h.b16 %v62
    %v252 = vunpack.c.l.b16 %v63
    %v253 = vunpack.c.h.b16 %v63
    %v254 = vunpack.c.l.b16 %v64
    %v255 = vunpack.c.h.b16 %v64
    %v256 = vunpack.c.l.b16 %v65
    %v257 = vunpack.c.h.b16 %v65
    %v258 = vunpack.c.l.b16 %v66
    %v259 = vunpack.c.h.b16 %v66
    %v260 = vunpack.c.l.b16 %v67
    %v261 = vunpack.c.h.b16 %v67
    %v262 = vunpack.c.l.b16 %v68
    %v263 = vunpack.c.h.b16 %v68
    %v264 = vunpack.c.l.b16 %v69
    %v265 = vunpack.c.h.b16 %v69
    %v266 = vpack.c.b16 %v182, %v178
    %v267 = vpack.c.b16 %v183, %v179
    %v268 = vpack.c.b16 %v184, %v180
    %v269 = vpack.c.b16 %v185, %v181
    %v270 = vpack.c.b16 %v190, %v186
    %v271 = vpack.c.b16 %v191, %v187
    %v272 = vpack.c.b16 %v192, %v188
    %v273 = vpack.c.b16 %v193, %v189
    %v274 = vpack.c.b16 %v198, %v194
    %v275 = vpack.c.b16 %v199, %v195
    %v276 = vpack.c.b16 %v200, %v196
    %v277 = vpack.c.b16 %v201, %v197
    %v278 = vpack.c.b16 %v206, %v202
    %v279 = vpack.c.b16 %v207, %v203
    %v280 = vpack.c.b16 %v208, %v204
    %v281 = vpack.c.b16 %v209, %v205
    %v282 = vpack.c.b16 %v214, %v210
    %v283 = vpack.c.b16 %v215, %v211
    %v284 = vpack.c.b16 %v216, %v212
    %v285 = vpack.c.b16 %v217, %v213
    %v286 = vpack.c.b16 %v222, %v218
    %v287 = vpack.c.b16 %v223, %v219
    %v288 = vpack.c.b16 %v224, %v220
    %v289 = vpack.c.b16 %v225, %v221
    %v290 = vpack.c.b16 %v230, %v226
    %v291 = vpack.c.b16 %v231, %v227
    %v292 = vpack.c.b16 %v232, %v228
    %v293 = vpack.c.b16 %v233, %v229
    %v294 = vpack.c.b16 %v238, %v234
    %v295 = vpack.c.b16 %v239, %v235
    %v296 = vpack.c.b16 %v240, %v236
    %v297 = vpack.c.b16 %v241, %v237
    %v298 = vpack.c.b16 %v246, %v242
    %v299 = vpack.c.b16 %v247, %v243
    %v300 = vpack.c.b16 %v248, %v244
    %v301 = vpack.c.b16 %v249, %v245
    %v302 = vpack.c.b16 %v254, %v250
    %v303 = vpack.c.b16 %v255, %v251
    %v304 = vpack.c.b16 %v256, %v252
    %v305 = vpack.c.b16 %v257, %v253
    %v306 = vpack.c.b16 %v262, %v258
    %v307 = vpack.c.b16 %v263, %v259
    %v308 = vpack.c.b16 %v264, %v260
    %v309 = vpack.c.b16 %v265, %v261
    %v418 = vunpack.c.l.b16 %v70
    %v419 = vunpack.c.l.b16 %v71
    %v420 = vunpack.c.l.b16 %v72
    %v421 = vunpack.c.l.b16 %v73
    %v422 = vunpack.c.l.b16 %v74
    %v423 = vunpack.c.l.b16 %v75
    %v424 = vunpack.c.l.b16 %v76
    %v425 = vunpack.c.l.b16 %v77
    %v426 = vunpack.c.l.b16 %v78
    %v427 = vunpack.c.l.b16 %v79
    %v428 = vunpack.c.l.b16 %v80
    %v429 = vunpack.c.l.b16 %v81
    %v430 = vunpack.c.l.b16 %v82
    %v431 = vunpack.c.l.b16 %v83
    %v432 = vunpack.c.l.b16 %v84
    %v433 = vunpack.c.l.b16 %v85
    %v434 = vunpack.c.l.b16 %v86
    %v435 = vunpack.c.l.b16 %v87
    %v436 = vunpack.c.l.b16 %v88
    %v437 = vunpack.c.l.b16 %v89
    %v438 = vunpack.c.l.b16 %v90
    %v439 = vunpack.c.l.b16 %v91
    %v440 = vunpack.c.l.b16 %v92
    %v441 = vunpack.c.l.b16 %v93
    %v442 = vunpack.c.l.b16 %v94
    %v443 = vunpack.c.l.b16 %v95
    %v444 = vunpack.c.l.b16 %v96
    %v445 = vunpack.c.l.b16 %v97
    %v446 = vunpack.c.l.b16 %v98
    %v447 = vunpack.c.l.b16 %v99
    %v448 = vunpack.c.l.b16 %v100
    %v449 = vunpack.c.l.b16 %v101
    %v450 = vunpack.c.l.b16 %v102
    %v451 = vunpack.c.l.b16 %v103
    %v452 = vunpack.c.l.b16 %v104
    %v453 = vunpack.c.l.b16 %v105
    %v454 = vunpack.c.l.b16 %v106
    %v455 = vunpack.c.l.b16 %v107
    %v456 = vunpack.c.l.b16 %v108
    %v457 = vunpack.c.l.b16 %v109
    %v458 = vunpack.c.l.b16 %v110
    %v459 = vunpack.c.l.b16 %v111
    %v460 = vunpack.c.l.b16 %v112
    %v461 = vunpack.c.l.b16 %v113
    %v462 = vunpack.c.l.b16 %v114
    %v463 = vunpack.c.l.b16 %v115
    %v464 = vunpack.c.l.b16 %v116
    %v465 = vunpack.c.l.b16 %v117
    %v466 = vunpack.c.l.b16 %v118
    %v467 = vunpack.c.l.b16 %v119
    %v468 = vunpack.c.l.b16 %v120
    %v469 = vunpack.c.l.b16 %v121
    %v470 = vunpack.c.l.b16 %v122
    %v471 = vunpack.c.l.b16 %v123
    %v472 = vunpack.c.l.b16 %v124
    %v473 = vunpack.c.l.b16 %v125
    %v474 = vunpack.c.l.b16 %v126
    %v475 = vunpack.c.l.b16 %v127
    %v476 = vunpack.c.l.b16 %v128
    %v477 = vunpack.c.l.b16 %v129
    %v478 = vunpack.c.l.b16 %v130
    %v479 = vunpack.c.l.b16 %v131
    %v480 = vunpack.c.l.b16 %v132
    %v481 = vunpack.c.l.b16 %v133
    %v482 = vpack.c.b16 %v419, %v418
    %v483 = vpack.c.b16 %v421, %v420
    %v484 = vpack.c.b16 %v423, %v422
    %v485 = vpack.c.b16 %v425, %v424
    %v486 = vpack.c.b16 %v427, %v426
    %v487 = vpack.c.b16 %v429, %v428
    %v488 = vpack.c.b16 %v431, %v430
    %v489 = vpack.c.b16 %v433, %v432
    %v490 = vpack.c.b16 %v435, %v434
    %v491 = vpack.c.b16 %v437, %v436
    %v492 = vpack.c.b16 %v439, %v438
    %v493 = vpack.c.b16 %v441, %v440
    %v494 = vpack.c.b16 %v443, %v442
    %v495 = vpack.c.b16 %v445, %v444
    %v496 = vpack.c.b16 %v447, %v446
    %v497 = vpack.c.b16 %v449, %v448
    %v498 = vpack.c.b16 %v451, %v450
    %v499 = vpack.c.b16 %v453, %v452
    %v500 = vpack.c.b16 %v455, %v454
    %v501 = vpack.c.b16 %v457, %v456
    %v502 = vpack.c.b16 %v459, %v458
    %v503 = vpack.c.b16 %v461, %v460
    %v504 = vpack.c.b16 %v463, %v462
    %v505 = vpack.c.b16 %v465, %v464
    %v506 = vpack.c.b16 %v467, %v466
    %v507 = vpack.c.b16 %v469, %v468
    %v508 = vpack.c.b16 %v471, %v470
    %v509 = vpack.c.b16 %v473, %v472
    %v510 = vpack.c.b16 %v475, %v474
    %v511 = vpack.c.b16 %v477, %v476
    %v512 = vpack.c.b16 %v479, %v478
    %v513 = vpack.c.b16 %v481, %v480
    %546 = vmatprep.subr.bf16.mxu0 0
    %547 = vmatpush1.bf16.msra.mxu0 %v482
    %548 = vmatprep.subr.bf16.mxu0 0
    %549 = vmatpush1.bf16.msra.mxu0 %v483
    %550 = vmatprep.subr.bf16.mxu0 0
    %551 = vmatpush1.bf16.msra.mxu0 %v484
    %552 = vmatprep.subr.bf16.mxu0 0
    %553 = vmatpush1.bf16.msra.mxu0 %v485
    %554 = vmatprep.subr.bf16.mxu0 0
    %555 = vmatpush1.bf16.msra.mxu0 %v486
    %556 = vmatprep.subr.bf16.mxu0 0
    %557 = vmatpush1.bf16.msra.mxu0 %v487
    %558 = vmatprep.subr.bf16.mxu0 0
    %559 = vmatpush1.bf16.msra.mxu0 %v488
    %560 = vmatprep.subr.bf16.mxu0 0
    %561 = vmatpush1.bf16.msra.mxu0 %v489
    %562 = vmatprep.subr.bf16.mxu0 0
    %563 = vmatpush1.bf16.msra.mxu0 %v490
    %564 = vmatprep.subr.bf16.mxu0 0
    %565 = vmatpush1.bf16.msra.mxu0 %v491
    %566 = vmatprep.subr.bf16.mxu0 0
    %567 = vmatpush1.bf16.msra.mxu0 %v492
    %568 = vmatprep.subr.bf16.mxu0 0
    %569 = vmatpush1.bf16.msra.mxu0 %v493
    %570 = vmatprep.subr.bf16.mxu0 0
    %571 = vmatpush1.bf16.msra.mxu0 %v494
    %572 = vmatprep.subr.bf16.mxu0 0
    %573 = vmatpush1.bf16.msra.mxu0 %v495
    %574 = vmatprep.subr.bf16.mxu0 0
    %575 = vmatpush1.bf16.msra.mxu0 %v496
    %576 = vmatprep.subr.bf16.mxu0 0
    %577 = vmatpush1.bf16.msra.mxu0 %v497
    %578 = vmatprep.mubr.bf16.mxu0 %v267
    %579 = vmatmul.mubr.bf16.gmra.mrb[0].mxu0 %v266
    %v580 = vpop.f32.mrb[0].mxu0
    %v581 = vadd.f32 0.0, %v580
    %v582 = vpop.f32.mrb[0].mxu0
    %v583 = vpop.f32.mrb[0].mxu0
    %v584 = vadd.f32 0.0, %v583
    %v585 = vpop.f32.mrb[0].mxu0
    %586 = vmatprep.mubr.bf16.mxu0 %v271
    %587 = vmatmul.mubr.bf16.gmra.mrb[0].mxu0 %v270
    %v588 = vpop.f32.mrb[0].mxu0
    %v589 = vadd.f32 0.0, %v588
    %v590 = vpop.f32.mrb[0].mxu0
    %v591 = vpop.f32.mrb[0].mxu0
    %v592 = vadd.f32 0.0, %v591
    %v593 = vpop.f32.mrb[0].mxu0
    %594 = vmatprep.mubr.bf16.mxu0 %v275
    %595 = vmatmul.mubr.bf16.gmra.mrb[0].mxu0 %v274
    %v596 = vpop.f32.mrb[0].mxu0
    %v597 = vadd.f32 0.0, %v596
    %v598 = vpop.f32.mrb[0].mxu0
    %v599 = vpop.f32.mrb[0].mxu0
    %v600 = vadd.f32 0.0, %v599
    %v601 = vpop.f32.mrb[0].mxu0
    %602 = vmatprep.mubr.bf16.mxu0 %v279
    %603 = vmatmul.mubr.bf16.gmra.mrb[0].mxu0 %v278
    %v604 = vpop.f32.mrb[0].mxu0
    %v605 = vadd.f32 0.0, %v604
    %v606 = vpop.f32.mrb[0].mxu0
    %v607 = vpop.f32.mrb[0].mxu0
    %v608 = vadd.f32 0.0, %v607
    %v609 = vpop.f32.mrb[0].mxu0
    %610 = vmatprep.mubr.bf16.mxu0 %v283
    %611 = vmatmul.mubr.bf16.gmra.mrb[0].mxu0 %v282
    %v612 = vpop.f32.mrb[0].mxu0
    %v613 = vadd.f32 0.0, %v612
    %v614 = vpop.f32.mrb[0].mxu0
    %v615 = vpop.f32.mrb[0].mxu0
    %v616 = vadd.f32 0.0, %v615
    %v617 = vpop.f32.mrb[0].mxu0
    %618 = vmatprep.mubr.bf16.mxu0 %v287
    %619 = vmatmul.mubr.bf16.gmra.mrb[0].mxu0 %v286
    %v620 = vpop.f32.mrb[0].mxu0
    %v621 = vadd.f32 0.0, %v620
    %v622 = vpop.f32.mrb[0].mxu0
    %v623 = vpop.f32.mrb[0].mxu0
    %v624 = vadd.f32 0.0, %v623
    %v625 = vpop.f32.mrb[0].mxu0
    %626 = vmatprep.mubr.bf16.mxu0 %v291
    %627 = vmatmul.mubr.bf16.gmra.mrb[0].mxu0 %v290
    %v628 = vpop.f32.mrb[0].mxu0
    %v629 = vadd.f32 0.0, %v628
    %v630 = vpop.f32.mrb[0].mxu0
    %v631 = vpop.f32.mrb[0].mxu0
    %v632 = vadd.f32 0.0, %v631
    %v633 = vpop.f32.mrb[0].mxu0
    %634 = vmatprep.mubr.bf16.mxu0 %v295
    %635 = vmatmul.mubr.bf16.gmra.mrb[0].mxu0 %v294
    %v636 = vpop.f32.mrb[0].mxu0
    %v637 = vadd.f32 0.0, %v636
    %v638 = vpop.f32.mrb[0].mxu0
    %v639 = vpop.f32.mrb[0].mxu0
    %v640 = vadd.f32 0.0, %v639
    %v641 = vpop.f32.mrb[0].mxu0
    %642 = vmatprep.mubr.bf16.mxu0 %v299
    %643 = vmatmul.mubr.bf16.gmra.mrb[0].mxu0 %v298
    %v644 = vpop.f32.mrb[0].mxu0
    %v645 = vadd.f32 0.0, %v644
    %v646 = vpop.f32.mrb[0].mxu0
    %v647 = vpop.f32.mrb[0].mxu0
    %v648 = vadd.f32 0.0, %v647
    %v649 = vpop.f32.mrb[0].mxu0
    %650 = vmatprep.mubr.bf16.mxu0 %v303
    %651 = vmatmul.mubr.bf16.gmra.mrb[0].mxu0 %v302
    %v652 = vpop.f32.mrb[0].mxu0
    %v653 = vadd.f32 0.0, %v652
    %v654 = vpop.f32.mrb[0].mxu0
    %v655 = vpop.f32.mrb[0].mxu0
    %v656 = vadd.f32 0.0, %v655
    %v657 = vpop.f32.mrb[0].mxu0
    %658 = vmatprep.mubr.bf16.mxu0 %v307
    %659 = vmatmul.mubr.bf16.gmra.mrb[0].mxu0 %v306
    %v660 = vpop.f32.mrb[0].mxu0
    %v661 = vadd.f32 0.0, %v660
    %v662 = vpop.f32.mrb[0].mxu0
    %v663 = vpop.f32.mrb[0].mxu0
    %v664 = vadd.f32 0.0, %v663
    %v665 = vpop.f32.mrb[0].mxu0
    %666 = vdwg.mxu0
    %667 = vmatprep.subr.bf16.mxu0 0
    %668 = vmatpush1.bf16.msra.mxu0 %v498
    %669 = vmatprep.subr.bf16.mxu0 0
    %670 = vmatpush1.bf16.msra.mxu0 %v499
    %671 = vmatprep.subr.bf16.mxu0 0
    %672 = vmatpush1.bf16.msra.mxu0 %v500
    %673 = vmatprep.subr.bf16.mxu0 0
    %674 = vmatpush1.bf16.msra.mxu0 %v501
    %675 = vmatprep.subr.bf16.mxu0 0
    %676 = vmatpush1.bf16.msra.mxu0 %v502
    %677 = vmatprep.subr.bf16.mxu0 0
    %678 = vmatpush1.bf16.msra.mxu0 %v503
    %679 = vmatprep.subr.bf16.mxu0 0
    %680 = vmatpush1.bf16.msra.mxu0 %v504
    %681 = vmatprep.subr.bf16.mxu0 0
    %682 = vmatpush1.bf16.msra.mxu0 %v505
    %683 = vmatprep.subr.bf16.mxu0 0
    %684 = vmatpush1.bf16.msra.mxu0 %v506
    %685 = vmatprep.subr.bf16.mxu0 0
    %686 = vmatpush1.bf16.msra.mxu0 %v507
    %687 = vmatprep.subr.bf16.mxu0 0
    %688 = vmatpush1.bf16.msra.mxu0 %v508
    %689 = vmatprep.subr.bf16.mxu0 0
    %690 = vmatpush1.bf16.msra.mxu0 %v509
    %691 = vmatprep.subr.bf16.mxu0 0
    %692 = vmatpush1.bf16.msra.mxu0 %v510
    %693 = vmatprep.subr.bf16.mxu0 0
    %694 = vmatpush1.bf16.msra.mxu0 %v511
    %695 = vmatprep.subr.bf16.mxu0 0
    %696 = vmatpush1.bf16.msra.mxu0 %v512
    %697 = vmatprep.subr.bf16.mxu0 0
    %698 = vmatpush1.bf16.msra.mxu0 %v513
    %699 = vmatprep.mubr.bf16.mxu0 %v269
    %700 = vmatmul.mubr.bf16.gmra.mrb[0].mxu0 %v268
    %v701 = vpop.f32.mrb[0].mxu0
    %v702 = vadd.f32 %v581, %v701
    %v703 = vpop.f32.mrb[0].mxu0
    %v704 = vpop.f32.mrb[0].mxu0
    %v705 = vadd.f32 %v584, %v704
    %v706 = vpop.f32.mrb[0].mxu0
    %707 = vmatprep.mubr.bf16.mxu0 %v273
    %708 = vmatmul.mubr.bf16.gmra.mrb[0].mxu0 %v272
    %v709 = vpop.f32.mrb[0].mxu0
    %v710 = vadd.f32 %v589, %v709
    %v711 = vpop.f32.mrb[0].mxu0
    %v712 = vpop.f32.mrb[0].mxu0
    %v713 = vadd.f32 %v592, %v712
    %v714 = vpop.f32.mrb[0].mxu0
    %715 = vmatprep.mubr.bf16.mxu0 %v277
    %716 = vmatmul.mubr.bf16.gmra.mrb[0].mxu0 %v276
    %v717 = vpop.f32.mrb[0].mxu0
    %v718 = vadd.f32 %v597, %v717
    %v719 = vpop.f32.mrb[0].mxu0
    %v720 = vpop.f32.mrb[0].mxu0
    %v721 = vadd.f32 %v600, %v720
    %v722 = vpop.f32.mrb[0].mxu0
    %723 = vmatprep.mubr.bf16.mxu0 %v281
    %724 = vmatmul.mubr.bf16.gmra.mrb[0].mxu0 %v280
    %v725 = vpop.f32.mrb[0].mxu0
    %v726 = vadd.f32 %v605, %v725
    %v727 = vpop.f32.mrb[0].mxu0
    %v728 = vpop.f32.mrb[0].mxu0
    %v729 = vadd.f32 %v608, %v728
    %v730 = vpop.f32.mrb[0].mxu0
    %731 = vmatprep.mubr.bf16.mxu0 %v285
    %732 = vmatmul.mubr.bf16.gmra.mrb[0].mxu0 %v284
    %v733 = vpop.f32.mrb[0].mxu0
    %v734 = vadd.f32 %v613, %v733
    %v735 = vpop.f32.mrb[0].mxu0
    %v736 = vpop.f32.mrb[0].mxu0
    %v737 = vadd.f32 %v616, %v736
    %v738 = vpop.f32.mrb[0].mxu0
    %739 = vmatprep.mubr.bf16.mxu0 %v289
    %740 = vmatmul.mubr.bf16.gmra.mrb[0].mxu0 %v288
    %v741 = vpop.f32.mrb[0].mxu0
    %v742 = vadd.f32 %v621, %v741
    %v743 = vpop.f32.mrb[0].mxu0
    %v744 = vpop.f32.mrb[0].mxu0
    %v745 = vadd.f32 %v624, %v744
    %v746 = vpop.f32.mrb[0].mxu0
    %747 = vmatprep.mubr.bf16.mxu0 %v293
    %748 = vmatmul.mubr.bf16.gmra.mrb[0].mxu0 %v292
    %v749 = vpop.f32.mrb[0].mxu0
    %v750 = vadd.f32 %v629, %v749
    %v751 = vpop.f32.mrb[0].mxu0
    %v752 = vpop.f32.mrb[0].mxu0
    %v753 = vadd.f32 %v632, %v752
    %v754 = vpop.f32.mrb[0].mxu0
    %755 = vmatprep.mubr.bf16.mxu0 %v297
    %756 = vmatmul.mubr.bf16.gmra.mrb[0].mxu0 %v296
    %v757 = vpop.f32.mrb[0].mxu0
    %v758 = vadd.f32 %v637, %v757
    %v759 = vpop.f32.mrb[0].mxu0
    %v760 = vpop.f32.mrb[0].mxu0
    %v761 = vadd.f32 %v640, %v760
    %v762 = vpop.f32.mrb[0].mxu0
    %763 = vmatprep.mubr.bf16.mxu0 %v301
    %764 = vmatmul.mubr.bf16.gmra.mrb[0].mxu0 %v300
    %v765 = vpop.f32.mrb[0].mxu0
    %v766 = vadd.f32 %v645, %v765
    %v767 = vpop.f32.mrb[0].mxu0
    %v768 = vpop.f32.mrb[0].mxu0
    %v769 = vadd.f32 %v648, %v768
    %v770 = vpop.f32.mrb[0].mxu0
    %771 = vmatprep.mubr.bf16.mxu0 %v305
    %772 = vmatmul.mubr.bf16.gmra.mrb[0].mxu0 %v304
    %v773 = vpop.f32.mrb[0].mxu0
    %v774 = vadd.f32 %v653, %v773
    %v775 = vpop.f32.mrb[0].mxu0
    %v776 = vpop.f32.mrb[0].mxu0
    %v777 = vadd.f32 %v656, %v776
    %v778 = vpop.f32.mrb[0].mxu0
    %779 = vmatprep.mubr.bf16.mxu0 %v309
    %780 = vmatmul.mubr.bf16.gmra.mrb[0].mxu0 %v308
    %v781 = vpop.f32.mrb[0].mxu0
    %v782 = vadd.f32 %v661, %v781
    %v783 = vpop.f32.mrb[0].mxu0
    %v784 = vpop.f32.mrb[0].mxu0
    %v785 = vadd.f32 %v664, %v784
    %v786 = vpop.f32.mrb[0].mxu0
    %787 = vdwg.mxu0
    %v788 = vmax.f32 %v702, 0.0
    %v789 = vmax.f32 %v705, 0.0
    %v790 = vmax.f32 %v710, 0.0
    %v791 = vmax.f32 %v713, 0.0
    %v792 = vmax.f32 %v718, 0.0
    %v793 = vmax.f32 %v721, 0.0
    %v794 = vmax.f32 %v726, 0.0
    %v795 = vmax.f32 %v729, 0.0
    %v796 = vmax.f32 %v734, 0.0
    %v797 = vmax.f32 %v737, 0.0
    %v798 = vmax.f32 %v742, 0.0
    %v799 = vmax.f32 %v745, 0.0
    %v800 = vmax.f32 %v750, 0.0
    %v801 = vmax.f32 %v753, 0.0
    %v802 = vmax.f32 %v758, 0.0
    %v803 = vmax.f32 %v761, 0.0
    %v804 = vmax.f32 %v766, 0.0
    %v805 = vmax.f32 %v769, 0.0
    %v806 = vmax.f32 %v774, 0.0
    %v807 = vmax.f32 %v777, 0.0
    %v808 = vmax.f32 %v782, 0.0
    %v809 = vmax.f32 %v785, 0.0
    %vm810 = vcmask 195584
    %811 = vst.msk [vmem:[%s2] sm:$0xff] %vm810, %v788
    %812 = vst.msk [vmem:[%s2 + $0x8] sm:$0xff] %vm810, %v789
    %813 = vst.msk [vmem:[%s2 + $0x10] sm:$0xff] %vm810, %v790
    %814 = vst.msk [vmem:[%s2 + $0x18] sm:$0xff] %vm810, %v791
    %815 = vst.msk [vmem:[%s2 + $0x20] sm:$0xff] %vm810, %v792
    %816 = vst.msk [vmem:[%s2 + $0x28] sm:$0xff] %vm810, %v793
    %817 = vst.msk [vmem:[%s2 + $0x30] sm:$0xff] %vm810, %v794
    %818 = vst.msk [vmem:[%s2 + $0x38] sm:$0xff] %vm810, %v795
    %819 = vst.msk [vmem:[%s2 + $0x40] sm:$0xff] %vm810, %v796
    %820 = vst.msk [vmem:[%s2 + $0x48] sm:$0xff] %vm810, %v797
    %821 = vst.msk [vmem:[%s2 + $0x50] sm:$0xff] %vm810, %v798
    %822 = vst.msk [vmem:[%s2 + $0x58] sm:$0xff] %vm810, %v799
    %823 = vst.msk [vmem:[%s2 + $0x60] sm:$0xff] %vm810, %v800
    %824 = vst.msk [vmem:[%s2 + $0x68] sm:$0xff] %vm810, %v801
    %825 = vst.msk [vmem:[%s2 + $0x70] sm:$0xff] %vm810, %v802
    %826 = vst.msk [vmem:[%s2 + $0x78] sm:$0xff] %vm810, %v803
    %827 = vst.msk [vmem:[%s2 + $0x80] sm:$0xff] %vm810, %v804
    %828 = vst.msk [vmem:[%s2 + $0x88] sm:$0xff] %vm810, %v805
    %829 = vst.msk [vmem:[%s2 + $0x90] sm:$0xff] %vm810, %v806
    %830 = vst.msk [vmem:[%s2 + $0x98] sm:$0xff] %vm810, %v807
    %831 = vst.msk [vmem:[%s2 + $0xa0] sm:$0xff] %vm810, %v808
    %832 = vst.msk [vmem:[%s2 + $0xa8] sm:$0xff] %vm810, %v809
    // Predicated region
    $region14: #{tpu_custom_call.1} parent=1 // pred_check
      _
    $region15: #{tpu_custom_call.1} parent=1 // pred_check_branch
      %834 = sbr.rel (0) target = $region17
    $region16: #{tpu_custom_call.1} parent=1 // pred_region
      _
    $region17: #{tpu_custom_call.1} parent=1 // pred_fallthru
      _
    // Predicated region
    $region18: #{tpu_custom_call.1} parent=1 // pred_check
      _
    $region19: #{tpu_custom_call.1} parent=1 // pred_check_branch
      %836 = sbr.rel (0) target = $region21
    $region20: #{tpu_custom_call.1} parent=1 // pred_region
      _
    $region21: #{tpu_custom_call.1} parent=1 // pred_fallthru
      _
    %837 = vsyncpa [#allocation3], 1

</llo_original>
